<compile_context>
chip_gen: v7x
topology: tpu7x:2x2x1
jax: 0.10.0
libtpu: 0.0.40
codegen_flags: <defaults>
</compile_context>

<pallas_src>
import jax
import jax.numpy as jnp
from jax.experimental import pallas as pl
from jax.experimental.pallas import tpu as pltpu


def _vdrop_kernel(x_ref, m_ref, o_ref):
    # Mask block has a size-1 temporal dimension -> broadcast multiply across time.
    o_ref[...] = x_ref[...] * m_ref[...]


def _pick_time_tile(T: int, row_bytes: int, target_bytes: int) -> int:
    """Pick a time-tile so one block is ~target_bytes; multiple of 8 (sublane rule)."""
    tt = int(max(1, target_bytes // max(row_bytes, 1)))
    if tt >= T:
        return T                    # full extent is always a legal block dim
    tt = max(8, (tt // 8) * 8)      # second-to-last block dim must be a multiple of 8
    return min(tt, T)


def variational_dropout(x, dropout: float, *, batch_first: bool = False,
                        training: bool = True, key=None,
                        target_block_bytes: int = 2 * 1024 * 1024):
    """JAX/Pallas equivalent of VariationalDropout.forward (dense tensors).

    x: (T, B, F) if batch_first=False, else (B, T, F).
    key: jax PRNG key for the dropout mask (varies per call in real training).
    """
    if (not training) or dropout <= 0.0:
        return x
    if key is None:
        key = jax.random.PRNGKey(0)

    keep_prob = 1.0 - float(dropout)
    itemsize = jnp.dtype(x.dtype).itemsize

    if batch_first:
        B, T, F = x.shape
    else:
        T, B, F = x.shape

    # One Bernoulli(keep_prob) draw per (batch, feature); inverted-dropout scaling.
    keep = jax.random.bernoulli(key, p=keep_prob, shape=(B, F))
    mask = keep.astype(x.dtype) * jnp.asarray(1.0 / keep_prob, dtype=x.dtype)

    row_bytes = B * F * itemsize                     # bytes per time step
    tt = _pick_time_tile(T, row_bytes, target_block_bytes)
    grid = (pl.cdiv(T, tt),)

    cost = pl.CostEstimate(
        flops=T * B * F,
        transcendentals=0,
        bytes_accessed=2 * T * B * F * itemsize + B * F * itemsize,
    )
    cparams = pltpu.CompilerParams(dimension_semantics=("parallel",))

    if batch_first:
        # Native (B, T, F) layout; broadcast mask over axis 1.
        m3 = mask.reshape(B, 1, F)
        out = pl.pallas_call(
            _vdrop_kernel,
            out_shape=jax.ShapeDtypeStruct((B, T, F), x.dtype),
            grid=grid,
            in_specs=[
                pl.BlockSpec((B, tt, F), lambda t: (0, t, 0)),
                pl.BlockSpec((B, 1, F), lambda t: (0, 0, 0)),   # resident across steps
            ],
            out_specs=pl.BlockSpec((B, tt, F), lambda t: (0, t, 0)),
            compiler_params=cparams,
            cost_estimate=cost,
        )(x, m3)
        return out

    # batch_first=False: flatten (T, B, F) -> (T, B*F) for lane-dense loads/stores.
    x2 = x.reshape(T, B * F)
    m2 = mask.reshape(1, B * F)
    out2 = pl.pallas_call(
        _vdrop_kernel,
        out_shape=jax.ShapeDtypeStruct((T, B * F), x.dtype),
        grid=grid,
        in_specs=[
            pl.BlockSpec((tt, B * F), lambda t: (t, 0)),
            pl.BlockSpec((1, B * F), lambda t: (0, 0)),         # resident across steps
        ],
        out_specs=pl.BlockSpec((tt, B * F), lambda t: (t, 0)),
        compiler_params=cparams,
        cost_estimate=cost,
    )(x2, m2)
    return out2.reshape(T, B, F)


if __name__ == "__main__":
    root = jax.random.PRNGKey(0)
    xkey, mkey = jax.random.split(root)

    T, B, F = 8, 2, 32                     # seq=8, batch=2, hidden=32
    p = 0.5
    x = jax.random.normal(xkey, (T, B, F), dtype=jnp.float32)   # batch_first=False layout

    out = variational_dropout(x, p, batch_first=False, training=True, key=mkey)
    out = jax.block_until_ready(out)

    # Reference: same mask drawn from the same key.
    keep = jax.random.bernoulli(mkey, p=1.0 - p, shape=(B, F))
    ref = jnp.where(keep[None, :, :], x / (1.0 - p), 0.0).astype(x.dtype)
    assert out.shape == x.shape and out.dtype == x.dtype
    assert bool(jnp.allclose(out, ref, atol=1e-6)), "mismatch vs reference"
    kept = out != 0.0
    assert bool(jnp.all(kept == kept[0][None, :, :])), "mask must be shared across time"

    # batch_first=True path, with a small block target to force a multi-step time grid
    # (exercises tiling / pipelining and mask residency across grid steps).
    T2 = 16
    x_bt = jax.random.normal(jax.random.PRNGKey(1), (B, T2, F), dtype=jnp.float32)
    out_bt = variational_dropout(x_bt, p, batch_first=True, training=True, key=mkey,
                                 target_block_bytes=2048)       # -> time tile 8, grid=(2,)
    out_bt = jax.block_until_ready(out_bt)
    ref_bt = jnp.where(keep[:, None, :], x_bt / (1.0 - p), 0.0).astype(x_bt.dtype)
    assert bool(jnp.allclose(out_bt, ref_bt, atol=1e-6)), "batch_first mismatch vs reference"

    # Eval mode / p <= 0 is identity.
    assert bool(jnp.all(variational_dropout(x, p, training=False) == x))
    assert bool(jnp.all(variational_dropout(x, 0.0, training=True) == x))

    print("KERNEL_OK")
</pallas_src>

<mosaic_0001>
module attributes {stable_mosaic.version = 11 : i64} {
  func.func @_vdrop_kernel(%arg0: i32, %arg1: memref<8x64xf32, #tpu.memory_space<vmem>>, %arg2: memref<1x64xf32, #tpu.memory_space<vmem>>, %arg3: memref<8x64xf32, #tpu.memory_space<vmem>>) attributes {dimension_semantics = [#tpu.dimension_semantics<parallel>], iteration_bounds = array<i64: 1>, scalar_prefetch = 0 : i64, scratch_operands = 0 : i64, tpu.core_type = #tpu.core_type<tc>, window_params = [{transform_indices = @transform_0, window_bounds = array<i64: 8, 64>}, {pipeline_mode = #tpu.pipeline_mode<synchronous>, transform_indices = @transform_1, window_bounds = array<i64: 1, 64>}, {transform_indices = @transform_2, window_bounds = array<i64: 8, 64>}]} {
    %c0 = arith.constant 0 : index
    %c0_0 = arith.constant 0 : index
    %0 = vector.load %arg1[%c0, %c0_0] : memref<8x64xf32, #tpu.memory_space<vmem>>, vector<8x64xf32>
    %c0_1 = arith.constant 0 : index
    %c0_2 = arith.constant 0 : index
    %1 = vector.load %arg2[%c0_1, %c0_2] : memref<1x64xf32, #tpu.memory_space<vmem>>, vector<1x64xf32>
    %2 = vector.broadcast %1 : vector<1x64xf32> to vector<8x64xf32>
    %3 = arith.mulf %0, %2 : vector<8x64xf32>
    %c0_3 = arith.constant 0 : index
    %c0_4 = arith.constant 0 : index
    %4 = vector.load %arg3[%c0_3, %c0_4] : memref<8x64xf32, #tpu.memory_space<vmem>>, vector<8x64xf32>
    tpu.vector_store %arg3[%c0_3, %c0_4], %3 {strides = array<i32>} : memref<8x64xf32, #tpu.memory_space<vmem>>, vector<8x64xf32>,
    return
  }
  func.func @transform_0(%arg0: i32) -> (i32, i32) {
    %c0_i32 = arith.constant 0 : i32
    %c0_i32_0 = arith.constant 0 : i32
    return %arg0, %c0_i32 : i32, i32
  }
  func.func @transform_1(%arg0: i32) -> (i32, i32) {
    %c0_i32 = arith.constant 0 : i32
    %c0_i32_0 = arith.constant 0 : i32
    %c0_i32_1 = arith.constant 0 : i32
    return %c0_i32, %c0_i32_0 : i32, i32
  }
  func.func @transform_2(%arg0: i32) -> (i32, i32) {
    %c0_i32 = arith.constant 0 : i32
    %c0_i32_0 = arith.constant 0 : i32
    return %arg0, %c0_i32 : i32, i32
  }
}

</mosaic_0001>

<llo_original>
// kernel: tpu_custom_call.1
$region0: #{tpu_custom_call.1}
  #allocation0 [shape = 'u32[]', space=smem, size = 0x4, offset = 0x4, fixed_abs, tag = 'smem constant byte address 0x4 - core index']
  #allocation1 [shape = 'u32[144,128]{1,0:T(1,128)}', space=vmem, size = 0x12000, scoped, tag = 'internal scratch']
  %s0 = inlined_call_operand.hbm [shape: f32[8,64], index: 0, kind: input, shape index: {}]
  %s1 = inlined_call_operand.vmem [shape: f32[1,64], index: 1, kind: input, shape index: {}]
  %s2 = inlined_call_operand.hbm [shape: f32[8,64], index: 2, kind: output, shape index: {}]
  %s3 = sld [smem:[#allocation0]]
  $region22: #{tpu_custom_call.1} parent=0
    _
  %s5 = ssub.s32 1, %s3
  %s6 = scalar_select 0, %s5, %s3
  $region1: #{tpu_custom_call.1} parent=0
    #allocation2 [shape = 'u8[4096]{0}', space=vmem, size = 0x1000, scoped, tag = 'input window, operand 0, single buffered']
    #allocation3 [shape = 's32[1]{0}', space=sflag, size = 0x4, scoped, tag = 'scoped memory for tpu_custom_call.1']
    #allocation4 [shape = 's32[1]{0}', space=sflag, size = 0x4, scoped, tag = 'scoped memory for tpu_custom_call.1']
    #allocation5 [shape = 'u8[4096]{0}', space=vmem, size = 0x1000, scoped, tag = 'output window, operand 0, single buffered']
    %7 = vsyncpa [#allocation3], 0
    %8 = vsyncpa [#allocation4], 0
    // Predicated region
    $region2: #{tpu_custom_call.1} parent=1 // pred_check
      _
    $region3: #{tpu_custom_call.1} parent=1 // pred_check_branch
      %10 = sbr.rel (0) target = $region5
    $region4: #{tpu_custom_call.1} parent=1 // pred_region
      %s12 = ssub.s32 128, 128
      %13 = vsyncadd [#allocation3], %s12
      %s15 = sshll.u32 [#allocation2], 4
      %s16 = int_to_ptr.vmem [resolvable:$true] %s15
      %18 = dma.hbm_to_vmem [thread:$0]  %s0, 128, %s16, [#allocation3]
    $region5: #{tpu_custom_call.1} parent=1 // pred_fallthru
      _
    // Predicated region
    $region6: #{tpu_custom_call.1} parent=1 // pred_check
      _
    $region7: #{tpu_custom_call.1} parent=1 // pred_check_branch
      %20 = sbr.rel (0) target = $region9
    $region8: #{tpu_custom_call.1} parent=1 // pred_region
      _
    $region9: #{tpu_custom_call.1} parent=1 // pred_fallthru
      _
    // Predicated region
    $region10: #{tpu_custom_call.1} parent=1 // pred_check
      _
    $region11: #{tpu_custom_call.1} parent=1 // pred_check_branch
      %22 = sbr.rel (0) target = $region13
    $region12: #{tpu_custom_call.1} parent=1 // pred_region
      %23 = dma.done [#allocation3], 128
    $region13: #{tpu_custom_call.1} parent=1 // pred_fallthru
      _
    %v24 = vld [vmem:[#allocation2] sm:$0xff]
    %v25 = vld [vmem:[%s1] sm:$0x1]
    %v27 = vlaneseq
    %v28 = vshrl.u32 %v27, 7
    %v29 = vsub.s32 0, %v28
    %v30 = vrot.slane %v25, %v29
    %v32 = vmul.f32 %v24, %v30
    %vm33 = vcmask 523264
    %34 = vst.msk [vmem:[#allocation5] sm:$0xff] %vm33, %v32
    // Predicated region
    $region14: #{tpu_custom_call.1} parent=1 // pred_check
      _
    $region15: #{tpu_custom_call.1} parent=1 // pred_check_branch
      %36 = sbr.rel (0) target = $region17
    $region16: #{tpu_custom_call.1} parent=1 // pred_region
      %s38 = ssub.s32 128, 128
      %39 = vsyncadd [#allocation4], %s38
      %s41 = sshll.u32 [#allocation5], 4
      %s42 = int_to_ptr.vmem [resolvable:$true] %s41
      %44 = dma.vmem_to_hbm [thread:$0]  %s42, 128, %s2, [#allocation4]
    $region17: #{tpu_custom_call.1} parent=1 // pred_fallthru
      _
    // Predicated region
    $region18: #{tpu_custom_call.1} parent=1 // pred_check
      _
    $region19: #{tpu_custom_call.1} parent=1 // pred_check_branch
      %46 = sbr.rel (0) target = $region21
    $region20: #{tpu_custom_call.1} parent=1 // pred_region
      %47 = dma.done [#allocation4], 128
    $region21: #{tpu_custom_call.1} parent=1 // pred_fallthru
      _
    %48 = vsyncpa [#allocation3], 1
    %49 = vsyncpa [#allocation4], 1

</llo_original>
